<compile_context>
chip_gen: v6e
topology: v6e:2x2x1
jax: 0.10.0
libtpu: 0.0.40
codegen_flags: <defaults>
</compile_context>

<pallas_src>
import functools

import jax
import jax.numpy as jnp
from jax.experimental import pallas as pl
from jax.experimental.pallas import tpu as pltpu

_BRANCHES = ((16, 0), (32, 8), (64, 24), (128, 56))  # (kernel, padding), stride 16
_STRIDE = 16
_EPS = 1e-5
_NOFF = 9     # block offsets -4..+4 (widest branch: K=128, pad=56)
_HALO = 16    # extra base rows streamed after each tile (>= 2*4, multiple of 16)


def _round_up(x, m):
    return (x + m - 1) // m * m


def _pick_tile_t(l_out, max_tile_t):
    """Row tile: multiple of 16, <= max_tile_t, with small zero-pad overhead."""
    max_tile = max(16, (max_tile_t // 16) * 16)
    if l_out <= max_tile:
        return _round_up(l_out, 16)
    for t in range(max_tile, 15, -16):
        if _round_up(l_out, t) - l_out <= max(l_out // 16, 16):
            return t
    return max_tile


# ----------------------------------------------------------------------------
# Pallas kernel: 9 shifted matmuls (all 4 conv branches) + BN shift + ReLU6
#                + 1x1 fusion matmul + bias + ReLU
# ----------------------------------------------------------------------------
def _fused_kernel(center_ref, halo_ref, woff_ref, shift_ref, wf_ref, bf_ref,
                  o_ref, buf_ref):
    t = center_ref.shape[0]

    # Assemble the haloed base-block tile (base rows [t0-8, t0+T+8)) into one
    # contiguous f32 VMEM scratch: the 9 shifted operands become simple
    # row-offset reads (no concat, no extra HBM traffic).
    buf_ref[pl.ds(0, t), :] = center_ref[...].astype(jnp.float32)
    buf_ref[pl.ds(t, _HALO), :] = halo_ref[...].astype(jnp.float32)

    # All 4 conv branches: sum over 9 block offsets of a lane-dense matmul
    # (T, C_in*16) @ (C_in*16, 4*C_out), f32 accumulation on the MXU.
    acc = jnp.dot(buf_ref[pl.ds(4, t), :].astype(woff_ref.dtype), woff_ref[0],
                  preferred_element_type=jnp.float32)
    for j in range(1, _NOFF):
        acc += jnp.dot(buf_ref[pl.ds(4 + j, t), :].astype(woff_ref.dtype),
                       woff_ref[j], preferred_element_type=jnp.float32)

    # Folded conv-bias + BN shift, then ReLU6.
    y = jnp.clip(acc + shift_ref[...], 0.0, 6.0)

    # 1x1 fusion conv == matmul over channels, + bias, then ReLU.
    z = jnp.dot(y.astype(wf_ref.dtype), wf_ref[...],
                preferred_element_type=jnp.float32) + bf_ref[...]
    o_ref[...] = jnp.maximum(z, 0.0).astype(o_ref.dtype)


# ----------------------------------------------------------------------------
# Parameter folding (BN scale into weights, bias+BN into one shift) and
# per-offset weight layout: W_off[j, c*16+l, b*C_out+o] = w_b[o, c, 16*(j-4)+l+pad_b]
# ----------------------------------------------------------------------------
def _fold_branch_weights(params, mm_dtype):
    w_offs, shifts = [], []
    for bi, (k, pad) in enumerate(_BRANCHES):
        w = params[f"w{bi}"].astype(jnp.float32)               # (Cout, Cin, K)
        c_out, c_in, _ = w.shape
        scale = params[f"gamma{bi}"] / jnp.sqrt(params[f"var{bi}"] + _EPS)
        shift = (params[f"b{bi}"] - params[f"mean{bi}"]) * scale + params[f"beta{bi}"]
        w = w * scale[:, None, None]                           # fold BN scale
        left = 4 * 16 - pad                                    # taps onto the 9x16 offset grid
        w = jnp.pad(w, ((0, 0), (0, 0), (left, _NOFF * 16 - k - left)))
        # (Cout, Cin, 9, 16) -> (9, Cin, 16, Cout) -> (9, Cin*16, Cout)
        w = w.reshape(c_out, c_in, _NOFF, 16).transpose(2, 1, 3, 0)
        w_offs.append(w.reshape(_NOFF, c_in * 16, c_out))
        shifts.append(shift)
    w_off = jnp.concatenate(w_offs, axis=-1).astype(mm_dtype)  # (9, Cin*16, 4*Cout)
    shift = jnp.concatenate(shifts).reshape(1, -1).astype(jnp.float32)
    return w_off, shift


def _build_base(x, l_out, tile_t, mm_dtype):
    """x: (N, Cin, L) -> zero-padded base blocks (N, P, Cin*16), bf16."""
    n, c_in, l = x.shape
    l16d = -(-l // 16)                       # include the partial tail block
    xb = jnp.pad(x.astype(mm_dtype), ((0, 0), (0, 0), (0, l16d * 16 - l)))
    base = xb.reshape(n, c_in, l16d, 16).transpose(0, 2, 1, 3)
    base = base.reshape(n, l16d, c_in * 16)
    l_out_pad = _round_up(l_out, tile_t)
    p = _round_up(max(l_out_pad, l16d) + _HALO, 16)
    # rows [0,8): left conv zero-pad; rows [8, 8+l16d): data; rest: zeros.
    base = jnp.pad(base, ((0, 0), (8, p - 8 - l16d), (0, 0)))
    return base, l_out_pad


# ----------------------------------------------------------------------------
# Forward wrapper (jitted): layout + pallas_call
# ----------------------------------------------------------------------------
@functools.partial(jax.jit, static_argnames=("max_tile_t", "use_bf16"))
def multi_features_forward(x, params, *, max_tile_t=1024, use_bf16=True):
    """x: (N, C_in, L) f32 -> (N, 4*C_out, L_out) f32 (PyTorch NCL layout)."""
    n, c_in, l = x.shape
    assert l >= 16, "sequence length must be >= smallest conv kernel (16)"
    l_out = (l - 16) // _STRIDE + 1          # identical for all four branches
    mm_dtype = jnp.bfloat16 if use_bf16 else jnp.float32

    c_out = params["w0"].shape[0]
    c_cat = 4 * c_out
    cb = c_in * 16

    tile_t = _pick_tile_t(l_out, max_tile_t)
    base, l_out_pad = _build_base(x, l_out, tile_t, mm_dtype)
    w_off, shift = _fold_branch_weights(params, mm_dtype)
    wf = params["wf"].reshape(c_cat, c_cat).T.astype(mm_dtype)   # (in, out)
    bf = params["bf"].reshape(1, c_cat).astype(jnp.float32)

    grid = (n, l_out_pad // tile_t)

    in_specs = [
        # base-block tile for this output tile (streamed, double-buffered)
        pl.BlockSpec((None, tile_t, cb), lambda b, i: (b, i, 0)),
        # 16 halo rows just past the tile (streamed)
        pl.BlockSpec((None, _HALO, cb),
                     lambda b, i: (b, (i + 1) * (tile_t // _HALO), 0)),
        # per-offset branch weights, BN shift, fusion weight/bias (resident)
        pl.BlockSpec((_NOFF, cb, c_cat), lambda b, i: (0, 0, 0)),
        pl.BlockSpec((1, c_cat), lambda b, i: (0, 0)),
        pl.BlockSpec((c_cat, c_cat), lambda b, i: (0, 0)),
        pl.BlockSpec((1, c_cat), lambda b, i: (0, 0)),
    ]
    out_spec = pl.BlockSpec((None, tile_t, c_cat), lambda b, i: (b, i, 0))

    itm = 2 if use_bf16 else 4
    vmem_bytes = (
        2 * tile_t * cb * itm            # center tile (double-buffered)
        + 2 * _HALO * cb * itm           # halo rows
        + 2 * tile_t * c_cat * 4         # output tile (f32)
        + 2 * _NOFF * cb * c_cat * itm   # branch weights
        + 2 * c_cat * c_cat * itm        # fusion weight
        + 4 * 2 * c_cat * 4              # shift + bias
        + (tile_t + _HALO) * cb * 4      # scratch
    )
    vmem_limit = int(min(max(2 * vmem_bytes, 16 * 1024 * 1024), 64 * 1024 * 1024))

    out = pl.pallas_call(
        _fused_kernel,
        out_shape=jax.ShapeDtypeStruct((n, l_out_pad, c_cat), jnp.float32),
        grid=grid,
        in_specs=in_specs,
        out_specs=out_spec,
        scratch_shapes=[pltpu.VMEM((tile_t + _HALO, cb), jnp.float32)],
        compiler_params=pltpu.CompilerParams(
            dimension_semantics=("parallel", "parallel"),
            vmem_limit_bytes=vmem_limit),
    )(base, base, w_off, shift, wf, bf)

    # (N, L_out_pad, 4*Cout) -> slice real rows -> NCL to match PyTorch.
    return jnp.transpose(out[:, :l_out, :], (0, 2, 1))


# ----------------------------------------------------------------------------
# Plain-JAX reference (exact conv semantics, f32) for the sanity check
# ----------------------------------------------------------------------------
def _reference(x, params):
    outs = []
    for bi, (k, pad) in enumerate(_BRANCHES):
        y = jax.lax.conv_general_dilated(
            x, params[f"w{bi}"], window_strides=(_STRIDE,), padding=[(pad, pad)],
            dimension_numbers=("NCH", "OIH", "NCH"))
        y = y + params[f"b{bi}"][None, :, None]
        y = (y - params[f"mean{bi}"][None, :, None]) / jnp.sqrt(
            params[f"var{bi}"][None, :, None] + _EPS)
        y = y * params[f"gamma{bi}"][None, :, None] + params[f"beta{bi}"][None, :, None]
        outs.append(jnp.clip(y, 0.0, 6.0))
    y = jnp.concatenate(outs, axis=1)
    z = jax.lax.conv_general_dilated(
        y, params["wf"], window_strides=(1,), padding=[(0, 0)],
        dimension_numbers=("NCH", "OIH", "NCH")) + params["bf"][None, :, None]
    return jnp.maximum(z, 0.0)


# ----------------------------------------------------------------------------
# Deterministic parameter init + demo
# ----------------------------------------------------------------------------
def _init_params(key, c_in, c_out):
    params = {}
    keys = jax.random.split(key, 4 * 6 + 2)
    ki = 0
    for bi, (k, _) in enumerate(_BRANCHES):
        params[f"w{bi}"] = 0.05 * jax.random.normal(keys[ki], (c_out, c_in, k), jnp.float32); ki += 1
        params[f"b{bi}"] = 0.1 * jax.random.normal(keys[ki], (c_out,), jnp.float32); ki += 1
        params[f"gamma{bi}"] = 1.0 + 0.1 * jax.random.normal(keys[ki], (c_out,), jnp.float32); ki += 1
        params[f"beta{bi}"] = 0.1 * jax.random.normal(keys[ki], (c_out,), jnp.float32); ki += 1
        params[f"mean{bi}"] = 0.05 * jax.random.normal(keys[ki], (c_out,), jnp.float32); ki += 1
        params[f"var{bi}"] = 1.0 + 0.1 * jax.random.uniform(keys[ki], (c_out,), jnp.float32); ki += 1
    c_cat = 4 * c_out
    params["wf"] = 0.05 * jax.random.normal(keys[ki], (c_cat, c_cat, 1), jnp.float32); ki += 1
    params["bf"] = 0.1 * jax.random.normal(keys[ki], (c_cat,), jnp.float32)
    return params


if __name__ == "__main__":
    key = jax.random.PRNGKey(0)
    k_x, k_p = jax.random.split(key)

    N, C_in, L = 2, 4, 256          # L divisible by 16 -> L_out = 16
    C_out = 32                      # per-branch channels -> 4*C_out = 128 lanes

    x = jax.random.normal(k_x, (N, C_in, L), jnp.float32)
    params = _init_params(k_p, C_in, C_out)

    out = multi_features_forward(x, params)
    out = jax.block_until_ready(out)

    ref = _reference(x, params)
    assert out.shape == (N, 4 * C_out, L // 16), out.shape
    # bf16 matmul inputs with f32 accumulation -> compare with loose tolerance.
    assert jnp.allclose(out, ref, atol=5e-2, rtol=5e-2), \
        f"max abs err {float(jnp.max(jnp.abs(out - ref)))}"

    print("KERNEL_OK")
</pallas_src>

<mosaic_0001>
module attributes {stable_mosaic.version = 11 : i64} {
  func.func @_fused_kernel(%arg0: i32, %arg1: i32, %arg2: memref<1x16x64xbf16, #tpu.memory_space<vmem>>, %arg3: memref<1x16x64xbf16, #tpu.memory_space<vmem>>, %arg4: memref<9x64x128xbf16, #tpu.memory_space<vmem>>, %arg5: memref<1x128xf32, #tpu.memory_space<vmem>>, %arg6: memref<128x128xbf16, #tpu.memory_space<vmem>>, %arg7: memref<1x128xf32, #tpu.memory_space<vmem>>, %arg8: memref<1x16x128xf32, #tpu.memory_space<vmem>>, %arg9: memref<32x64xf32, #tpu.memory_space<vmem>>) attributes {dimension_semantics = [#tpu.dimension_semantics<parallel>, #tpu.dimension_semantics<parallel>], iteration_bounds = array<i64: 2, 1>, scalar_prefetch = 0 : i64, scratch_operands = 1 : i64, tpu.core_type = #tpu.core_type<tc>, window_params = [{transform_indices = @transform_0, window_bounds = array<i64: 1, 16, 64>}, {transform_indices = @transform_1, window_bounds = array<i64: 1, 16, 64>}, {pipeline_mode = #tpu.pipeline_mode<synchronous>, transform_indices = @transform_2, window_bounds = array<i64: 9, 64, 128>}, {pipeline_mode = #tpu.pipeline_mode<synchronous>, transform_indices = @transform_3, window_bounds = array<i64: 1, 128>}, {pipeline_mode = #tpu.pipeline_mode<synchronous>, transform_indices = @transform_4, window_bounds = array<i64: 128, 128>}, {pipeline_mode = #tpu.pipeline_mode<synchronous>, transform_indices = @transform_5, window_bounds = array<i64: 1, 128>}, {transform_indices = @transform_6, window_bounds = array<i64: 1, 16, 128>}]} {
    %c0 = arith.constant 0 : index
    %c0_0 = arith.constant 0 : index
    %c0_1 = arith.constant 0 : index
    %0 = vector.load %arg2[%c0, %c0_0, %c0_1] : memref<1x16x64xbf16, #tpu.memory_space<vmem>>, vector<1x16x64xbf16>
    %1 = vector.shape_cast %0 : vector<1x16x64xbf16> to vector<16x64xbf16>
    %2 = arith.extf %1 : vector<16x64xbf16> to vector<16x64xf32>
    %c0_2 = arith.constant 0 : index
    %c0_3 = arith.constant 0 : index
    %3 = vector.load %arg9[%c0_2, %c0_3] : memref<32x64xf32, #tpu.memory_space<vmem>>, vector<16x64xf32>
    tpu.vector_store %arg9[%c0_2, %c0_3], %2 {strides = array<i32>} : memref<32x64xf32, #tpu.memory_space<vmem>>, vector<16x64xf32>,
    %c0_4 = arith.constant 0 : index
    %c0_5 = arith.constant 0 : index
    %c0_6 = arith.constant 0 : index
    %4 = vector.load %arg3[%c0_4, %c0_5, %c0_6] : memref<1x16x64xbf16, #tpu.memory_space<vmem>>, vector<1x16x64xbf16>
    %5 = vector.shape_cast %4 : vector<1x16x64xbf16> to vector<16x64xbf16>
    %6 = arith.extf %5 : vector<16x64xbf16> to vector<16x64xf32>
    %c16 = arith.constant 16 : index
    %c0_7 = arith.constant 0 : index
    %7 = vector.load %arg9[%c16, %c0_7] : memref<32x64xf32, #tpu.memory_space<vmem>>, vector<16x64xf32>
    tpu.vector_store %arg9[%c16, %c0_7], %6 {strides = array<i32>} : memref<32x64xf32, #tpu.memory_space<vmem>>, vector<16x64xf32>,
    %c4 = arith.constant 4 : index
    %c0_8 = arith.constant 0 : index
    %8 = vector.load %arg9[%c4, %c0_8] : memref<32x64xf32, #tpu.memory_space<vmem>>, vector<16x64xf32>
    %9 = arith.truncf %8 : vector<16x64xf32> to vector<16x64xbf16>
    %c0_9 = arith.constant 0 : index
    %c0_10 = arith.constant 0 : index
    %c0_11 = arith.constant 0 : index
    %10 = vector.load %arg4[%c0_9, %c0_10, %c0_11] : memref<9x64x128xbf16, #tpu.memory_space<vmem>>, vector<1x64x128xbf16>
    %11 = vector.shape_cast %10 : vector<1x64x128xbf16> to vector<64x128xbf16>
    %cst = arith.constant dense<0.000000e+00> : vector<16x128xf32>
    %12 = tpu.matmul %9, %11, %cst {dimension_numbers = #tpu.dot_dimension_numbers<[1], [0], [0], [1], [0, 0, 1, 1], [], []>} : vector<16x64xbf16>, vector<64x128xbf16>, vector<16x128xf32> -> vector<16x128xf32>
    %c5 = arith.constant 5 : index
    %c0_12 = arith.constant 0 : index
    %13 = vector.load %arg9[%c5, %c0_12] : memref<32x64xf32, #tpu.memory_space<vmem>>, vector<16x64xf32>
    %14 = arith.truncf %13 : vector<16x64xf32> to vector<16x64xbf16>
    %c1 = arith.constant 1 : index
    %c0_13 = arith.constant 0 : index
    %c0_14 = arith.constant 0 : index
    %15 = vector.load %arg4[%c1, %c0_13, %c0_14] : memref<9x64x128xbf16, #tpu.memory_space<vmem>>, vector<1x64x128xbf16>
    %16 = vector.shape_cast %15 : vector<1x64x128xbf16> to vector<64x128xbf16>
    %cst_15 = arith.constant dense<0.000000e+00> : vector<16x128xf32>
    %17 = tpu.matmul %14, %16, %cst_15 {dimension_numbers = #tpu.dot_dimension_numbers<[1], [0], [0], [1], [0, 0, 1, 1], [], []>} : vector<16x64xbf16>, vector<64x128xbf16>, vector<16x128xf32> -> vector<16x128xf32>
    %18 = arith.addf %12, %17 : vector<16x128xf32>
    %c6 = arith.constant 6 : index
    %c0_16 = arith.constant 0 : index
    %19 = vector.load %arg9[%c6, %c0_16] : memref<32x64xf32, #tpu.memory_space<vmem>>, vector<16x64xf32>
    %20 = arith.truncf %19 : vector<16x64xf32> to vector<16x64xbf16>
    %c2 = arith.constant 2 : index
    %c0_17 = arith.constant 0 : index
    %c0_18 = arith.constant 0 : index
    %21 = vector.load %arg4[%c2, %c0_17, %c0_18] : memref<9x64x128xbf16, #tpu.memory_space<vmem>>, vector<1x64x128xbf16>
    %22 = vector.shape_cast %21 : vector<1x64x128xbf16> to vector<64x128xbf16>
    %cst_19 = arith.constant dense<0.000000e+00> : vector<16x128xf32>
    %23 = tpu.matmul %20, %22, %cst_19 {dimension_numbers = #tpu.dot_dimension_numbers<[1], [0], [0], [1], [0, 0, 1, 1], [], []>} : vector<16x64xbf16>, vector<64x128xbf16>, vector<16x128xf32> -> vector<16x128xf32>
    %24 = arith.addf %18, %23 : vector<16x128xf32>
    %c7 = arith.constant 7 : index
    %c0_20 = arith.constant 0 : index
    %25 = vector.load %arg9[%c7, %c0_20] : memref<32x64xf32, #tpu.memory_space<vmem>>, vector<16x64xf32>
    %26 = arith.truncf %25 : vector<16x64xf32> to vector<16x64xbf16>
    %c3 = arith.constant 3 : index
    %c0_21 = arith.constant 0 : index
    %c0_22 = arith.constant 0 : index
    %27 = vector.load %arg4[%c3, %c0_21, %c0_22] : memref<9x64x128xbf16, #tpu.memory_space<vmem>>, vector<1x64x128xbf16>
    %28 = vector.shape_cast %27 : vector<1x64x128xbf16> to vector<64x128xbf16>
    %cst_23 = arith.constant dense<0.000000e+00> : vector<16x128xf32>
    %29 = tpu.matmul %26, %28, %cst_23 {dimension_numbers = #tpu.dot_dimension_numbers<[1], [0], [0], [1], [0, 0, 1, 1], [], []>} : vector<16x64xbf16>, vector<64x128xbf16>, vector<16x128xf32> -> vector<16x128xf32>
    %30 = arith.addf %24, %29 : vector<16x128xf32>
    %c8 = arith.constant 8 : index
    %c0_24 = arith.constant 0 : index
    %31 = vector.load %arg9[%c8, %c0_24] : memref<32x64xf32, #tpu.memory_space<vmem>>, vector<16x64xf32>
    %32 = arith.truncf %31 : vector<16x64xf32> to vector<16x64xbf16>
    %c4_25 = arith.constant 4 : index
    %c0_26 = arith.constant 0 : index
    %c0_27 = arith.constant 0 : index
    %33 = vector.load %arg4[%c4_25, %c0_26, %c0_27] : memref<9x64x128xbf16, #tpu.memory_space<vmem>>, vector<1x64x128xbf16>
    %34 = vector.shape_cast %33 : vector<1x64x128xbf16> to vector<64x128xbf16>
    %cst_28 = arith.constant dense<0.000000e+00> : vector<16x128xf32>
    %35 = tpu.matmul %32, %34, %cst_28 {dimension_numbers = #tpu.dot_dimension_numbers<[1], [0], [0], [1], [0, 0, 1, 1], [], []>} : vector<16x64xbf16>, vector<64x128xbf16>, vector<16x128xf32> -> vector<16x128xf32>
    %36 = arith.addf %30, %35 : vector<16x128xf32>
    %c9 = arith.constant 9 : index
    %c0_29 = arith.constant 0 : index
    %37 = vector.load %arg9[%c9, %c0_29] : memref<32x64xf32, #tpu.memory_space<vmem>>, vector<16x64xf32>
    %38 = arith.truncf %37 : vector<16x64xf32> to vector<16x64xbf16>
    %c5_30 = arith.constant 5 : index
    %c0_31 = arith.constant 0 : index
    %c0_32 = arith.constant 0 : index
    %39 = vector.load %arg4[%c5_30, %c0_31, %c0_32] : memref<9x64x128xbf16, #tpu.memory_space<vmem>>, vector<1x64x128xbf16>
    %40 = vector.shape_cast %39 : vector<1x64x128xbf16> to vector<64x128xbf16>
    %cst_33 = arith.constant dense<0.000000e+00> : vector<16x128xf32>
    %41 = tpu.matmul %38, %40, %cst_33 {dimension_numbers = #tpu.dot_dimension_numbers<[1], [0], [0], [1], [0, 0, 1, 1], [], []>} : vector<16x64xbf16>, vector<64x128xbf16>, vector<16x128xf32> -> vector<16x128xf32>
    %42 = arith.addf %36, %41 : vector<16x128xf32>
    %c10 = arith.constant 10 : index
    %c0_34 = arith.constant 0 : index
    %43 = vector.load %arg9[%c10, %c0_34] : memref<32x64xf32, #tpu.memory_space<vmem>>, vector<16x64xf32>
    %44 = arith.truncf %43 : vector<16x64xf32> to vector<16x64xbf16>
    %c6_35 = arith.constant 6 : index
    %c0_36 = arith.constant 0 : index
    %c0_37 = arith.constant 0 : index
    %45 = vector.load %arg4[%c6_35, %c0_36, %c0_37] : memref<9x64x128xbf16, #tpu.memory_space<vmem>>, vector<1x64x128xbf16>
    %46 = vector.shape_cast %45 : vector<1x64x128xbf16> to vector<64x128xbf16>
    %cst_38 = arith.constant dense<0.000000e+00> : vector<16x128xf32>
    %47 = tpu.matmul %44, %46, %cst_38 {dimension_numbers = #tpu.dot_dimension_numbers<[1], [0], [0], [1], [0, 0, 1, 1], [], []>} : vector<16x64xbf16>, vector<64x128xbf16>, vector<16x128xf32> -> vector<16x128xf32>
    %48 = arith.addf %42, %47 : vector<16x128xf32>
    %c11 = arith.constant 11 : index
    %c0_39 = arith.constant 0 : index
    %49 = vector.load %arg9[%c11, %c0_39] : memref<32x64xf32, #tpu.memory_space<vmem>>, vector<16x64xf32>
    %50 = arith.truncf %49 : vector<16x64xf32> to vector<16x64xbf16>
    %c7_40 = arith.constant 7 : index
    %c0_41 = arith.constant 0 : index
    %c0_42 = arith.constant 0 : index
    %51 = vector.load %arg4[%c7_40, %c0_41, %c0_42] : memref<9x64x128xbf16, #tpu.memory_space<vmem>>, vector<1x64x128xbf16>
    %52 = vector.shape_cast %51 : vector<1x64x128xbf16> to vector<64x128xbf16>
    %cst_43 = arith.constant dense<0.000000e+00> : vector<16x128xf32>
    %53 = tpu.matmul %50, %52, %cst_43 {dimension_numbers = #tpu.dot_dimension_numbers<[1], [0], [0], [1], [0, 0, 1, 1], [], []>} : vector<16x64xbf16>, vector<64x128xbf16>, vector<16x128xf32> -> vector<16x128xf32>
    %54 = arith.addf %48, %53 : vector<16x128xf32>
    %c12 = arith.constant 12 : index
    %c0_44 = arith.constant 0 : index
    %55 = vector.load %arg9[%c12, %c0_44] : memref<32x64xf32, #tpu.memory_space<vmem>>, vector<16x64xf32>
    %56 = arith.truncf %55 : vector<16x64xf32> to vector<16x64xbf16>
    %c8_45 = arith.constant 8 : index
    %c0_46 = arith.constant 0 : index
    %c0_47 = arith.constant 0 : index
    %57 = vector.load %arg4[%c8_45, %c0_46, %c0_47] : memref<9x64x128xbf16, #tpu.memory_space<vmem>>, vector<1x64x128xbf16>
    %58 = vector.shape_cast %57 : vector<1x64x128xbf16> to vector<64x128xbf16>
    %cst_48 = arith.constant dense<0.000000e+00> : vector<16x128xf32>
    %59 = tpu.matmul %56, %58, %cst_48 {dimension_numbers = #tpu.dot_dimension_numbers<[1], [0], [0], [1], [0, 0, 1, 1], [], []>} : vector<16x64xbf16>, vector<64x128xbf16>, vector<16x128xf32> -> vector<16x128xf32>
    %60 = arith.addf %54, %59 : vector<16x128xf32>
    %c0_49 = arith.constant 0 : index
    %c0_50 = arith.constant 0 : index
    %61 = vector.load %arg5[%c0_49, %c0_50] : memref<1x128xf32, #tpu.memory_space<vmem>>, vector<1x128xf32>
    %62 = vector.broadcast %61 : vector<1x128xf32> to vector<16x128xf32>
    %63 = arith.addf %60, %62 : vector<16x128xf32>
    %cst_51 = arith.constant 0.000000e+00 : f32
    %cst_52 = arith.constant 6.000000e+00 : f32
    %64 = vector.broadcast %cst_51 : f32 to vector<16x128xf32>
    %65 = arith.maximumf %64, %63 : vector<16x128xf32>
    %66 = vector.broadcast %cst_52 : f32 to vector<16x128xf32>
    %67 = arith.minimumf %66, %65 : vector<16x128xf32>
    %68 = arith.truncf %67 : vector<16x128xf32> to vector<16x128xbf16>
    %c0_53 = arith.constant 0 : index
    %c0_54 = arith.constant 0 : index
    %69 = vector.load %arg6[%c0_53, %c0_54] : memref<128x128xbf16, #tpu.memory_space<vmem>>, vector<128x128xbf16>
    %cst_55 = arith.constant dense<0.000000e+00> : vector<16x128xf32>
    %70 = tpu.matmul %68, %69, %cst_55 {dimension_numbers = #tpu.dot_dimension_numbers<[1], [0], [0], [1], [0, 0, 1, 1], [], []>} : vector<16x128xbf16>, vector<128x128xbf16>, vector<16x128xf32> -> vector<16x128xf32>
    %c0_56 = arith.constant 0 : index
    %c0_57 = arith.constant 0 : index
    %71 = vector.load %arg7[%c0_56, %c0_57] : memref<1x128xf32, #tpu.memory_space<vmem>>, vector<1x128xf32>
    %72 = vector.broadcast %71 : vector<1x128xf32> to vector<16x128xf32>
    %73 = arith.addf %70, %72 : vector<16x128xf32>
    %cst_58 = arith.constant 0.000000e+00 : f32
    %74 = vector.broadcast %cst_58 : f32 to vector<16x128xf32>
    %75 = arith.maximumf %73, %74 : vector<16x128xf32>
    %c0_59 = arith.constant 0 : index
    %c0_60 = arith.constant 0 : index
    %c0_61 = arith.constant 0 : index
    %76 = vector.load %arg8[%c0_59, %c0_60, %c0_61] : memref<1x16x128xf32, #tpu.memory_space<vmem>>, vector<1x16x128xf32>
    %77 = vector.shape_cast %76 : vector<1x16x128xf32> to vector<16x128xf32>
    %78 = vector.shape_cast %75 : vector<16x128xf32> to vector<1x16x128xf32>
    tpu.vector_store %arg8[%c0_59, %c0_60, %c0_61], %78 {strides = array<i32>} : memref<1x16x128xf32, #tpu.memory_space<vmem>>, vector<1x16x128xf32>,
    return
  }
  func.func @transform_0(%arg0: i32, %arg1: i32) -> (i32, i32, i32) {
    %c0_i32 = arith.constant 0 : i32
    %c0_i32_0 = arith.constant 0 : i32
    return %arg0, %arg1, %c0_i32 : i32, i32, i32
  }
  func.func @transform_1(%arg0: i32, %arg1: i32) -> (i32, i32, i32) {
    %c1_i32 = arith.constant 1 : i32
    %0 = arith.addi %arg1, %c1_i32 : i32
    %c1_i32_0 = arith.constant 1 : i32
    %1 = arith.muli %0, %c1_i32_0 : i32
    %c0_i32 = arith.constant 0 : i32
    %c0_i32_1 = arith.constant 0 : i32
    return %arg0, %1, %c0_i32 : i32, i32, i32
  }
  func.func @transform_2(%arg0: i32, %arg1: i32) -> (i32, i32, i32) {
    %c0_i32 = arith.constant 0 : i32
    %c0_i32_0 = arith.constant 0 : i32
    %c0_i32_1 = arith.constant 0 : i32
    %c0_i32_2 = arith.constant 0 : i32
    return %c0_i32, %c0_i32_0, %c0_i32_1 : i32, i32, i32
  }
  func.func @transform_3(%arg0: i32, %arg1: i32) -> (i32, i32) {
    %c0_i32 = arith.constant 0 : i32
    %c0_i32_0 = arith.constant 0 : i32
    %c0_i32_1 = arith.constant 0 : i32
    return %c0_i32, %c0_i32_0 : i32, i32
  }
  func.func @transform_4(%arg0: i32, %arg1: i32) -> (i32, i32) {
    %c0_i32 = arith.constant 0 : i32
    %c0_i32_0 = arith.constant 0 : i32
    %c0_i32_1 = arith.constant 0 : i32
    return %c0_i32, %c0_i32_0 : i32, i32
  }
  func.func @transform_5(%arg0: i32, %arg1: i32) -> (i32, i32) {
    %c0_i32 = arith.constant 0 : i32
    %c0_i32_0 = arith.constant 0 : i32
    %c0_i32_1 = arith.constant 0 : i32
    return %c0_i32, %c0_i32_0 : i32, i32
  }
  func.func @transform_6(%arg0: i32, %arg1: i32) -> (i32, i32, i32) {
    %c0_i32 = arith.constant 0 : i32
    %c0_i32_0 = arith.constant 0 : i32
    return %arg0, %arg1, %c0_i32 : i32, i32, i32
  }
}

</mosaic_0001>

<llo_original>
// kernel: multi_features_forward.1
$region0: #{multi_features_forward.1}
  #allocation0 [shape = 'u32[]', space=smem, size = 0x4, offset = 0x4, fixed_abs, tag = 'smem constant byte address 0x4 - core index']
  #allocation1 [shape = 'u32[144,128]{1,0:T(1,128)}', space=vmem, size = 0x12000, scoped, tag = 'internal scratch']
  #allocation2 [shape = 'f32[32,64]{1,0:T(8,128)}', space=vmem, size = 0x4000, scoped, tag = 'scratch operand']
  %s0 = inlined_call_operand.vmem [shape: bf16[2,32,64], index: 0, kind: input, shape index: {}, may-alias: {0,1}]
  %s1 = inlined_call_operand.vmem [shape: bf16[2,32,64], index: 1, kind: input, shape index: {}, may-alias: {0,1}]
  %s2 = inlined_call_operand.vmem [shape: bf16[9,64,128], index: 2, kind: input, shape index: {}]
  %s3 = inlined_call_operand.vmem [shape: f32[1,128], index: 3, kind: input, shape index: {}]
  %s4 = inlined_call_operand.vmem [shape: bf16[128,128], index: 4, kind: input, shape index: {}]
  %s5 = inlined_call_operand.vmem [shape: f32[1,128], index: 5, kind: input, shape index: {}]
  %s6 = inlined_call_operand.hbm [shape: f32[2,16,128], index: 6, kind: output, shape index: {}]
  %s7 = sld [smem:[#allocation0]]
  $region57: #{multi_features_forward.1} parent=0
    _
  %s9 = ssub.s32 1, %s7
  %s10 = scalar_select 0, %s9, %s7
  $region1: #{multi_features_forward.1} parent=0
    #allocation3 [shape = 'u8[16384]{0}', space=vmem, size = 0x4000, scoped, tag = 'output window, operand 0']
    #allocation4 [shape = 's32[2]{0}', space=sflag, size = 0x8, scoped, tag = 'scoped memory for multi_features_forward.1']
    %11 = vsyncpa [#allocation4], 0
    %s12 = scalar_lea.sflag [#allocation4], 1
    %13 = vsyncpa %s12, 0
    loop: start=0, step=1, limit=4
    $region2: #{multi_features_forward.1} parent=1 // loop_pre_header
      _
    $region3: #{multi_features_forward.1} parent=1 // loop_header
      %s15 = sphi 0, %s19
      %p16 = scmp.ge.s32.totalorder %s15, 4
      %s22 = sphi 0, %s34
      %s23 = sphi 0, %s30
      %s24 = sphi 0, %s22
      %s25 = sphi 0, %s23
      %s26 = sphi 0, %s24
      %s27 = sphi 0, %s25
      %s39 = sphi 0, %s41
      %s42 = sphi 0, %s39
      %s43 = sphi 0, %s42
      %s59 = sphi 0, %s43
      %s69 = sphi 0, %s71
      %s72 = sphi 0, %s69
      %s73 = sphi 0, %s72
      %s89 = sphi 0, %s73
      %s93 = sphi 0, %s93
      %s95 = sphi 0, %s93
      %s96 = sphi 0, %s95
      %s110 = sphi 0, %s96
      %s114 = sphi 0, %s114
      %s116 = sphi 0, %s114
      %s117 = sphi 0, %s116
      %s131 = sphi 0, %s117
      %s135 = sphi 0, %s135
      %s137 = sphi 0, %s135
      %s138 = sphi 0, %s137
      %s152 = sphi 0, %s138
      %s156 = sphi 0, %s156
      %s158 = sphi 0, %s156
      %s159 = sphi 0, %s158
      %s173 = sphi 0, %s159
      %s181 = sphi 0, %s183
      %s184 = sphi 0, %s181
      %s185 = sphi 0, %s184
      %s201 = sphi 0, %s185
    $region4: #{multi_features_forward.1} parent=1 // loop_header_branch
      %18 = sbr.rel (%p16) target = $region8
    $region5: #{multi_features_forward.1} parent=1 // loop_body
      %s20 = ssub.s32 %s15, 1
      %s21 = ssub.s32 %s15, 2
      %s28 = sadd.s32 1, %s23
      %p29 = scmp.ge.s32.totalorder %s28, 1
      %s30 = scalar_select %p29, 0, %s28
      %s31 = sadd.s32 1, %s22
      %s32 = scalar_select %p29, %s31, %s22
      %p33 = scmp.ge.s32.totalorder %s32, 2
      %s34 = scalar_select %p33, 0, %s32
      %s35 = ssub.s32 %s22, %s34
      %s36 = ssub.s32 %s23, %s30
      %s37 = sor.u32 %s35, %s36
      %p38 = scmp.eq.s32.totalorder %s37, 0
      %s40 = sadd.s32 %s39, 1
      %s41 = scalar_select %p38, %s39, %s40
      %p44 = pneg %p38
      %p45 = scmp.eq.s32.totalorder %s15, 1
      %p46 = por %p44, %p45
      %p47 = scmp.ne.s32.totalorder %s39, %s42
      %p48 = scmp.eq.s32.totalorder %s15, 0
      %p49 = por %p47, %p48
      %p50 = scmp.ne.s32.totalorder %s39, %s42
      %p51 = scmp.eq.s32.totalorder %s20, 1
      %p52 = por %p50, %p51
      %p53 = scmp.ne.s32.totalorder %s42, %s43
      %p54 = scmp.eq.s32.totalorder %s20, 0
      %p55 = por %p53, %p54
      %p56 = scmp.ne.s32.totalorder %s42, %s43
      %p57 = scmp.eq.s32.totalorder %s21, 1
      %p58 = por %p56, %p57
      %p60 = scmp.ne.s32.totalorder %s43, %s59
      %p61 = scmp.eq.s32.totalorder %s21, 0
      %p62 = por %p60, %p61
      %s63 = sadd.s32 %s23, 1
      %s64 = sadd.s32 %s30, 1
      %s65 = ssub.s32 %s22, %s34
      %s66 = ssub.s32 %s63, %s64
      %s67 = sor.u32 %s65, %s66
      %p68 = scmp.eq.s32.totalorder %s67, 0
      %s70 = sadd.s32 %s69, 1
      %s71 = scalar_select %p68, %s69, %s70
      %p74 = pneg %p68
      %p75 = scmp.eq.s32.totalorder %s15, 1
      %p76 = por %p74, %p75
      %p77 = scmp.ne.s32.totalorder %s69, %s72
      %p78 = scmp.eq.s32.totalorder %s15, 0
      %p79 = por %p77, %p78
      %p80 = scmp.ne.s32.totalorder %s69, %s72
      %p81 = scmp.eq.s32.totalorder %s20, 1
      %p82 = por %p80, %p81
      %p83 = scmp.ne.s32.totalorder %s72, %s73
      %p84 = scmp.eq.s32.totalorder %s20, 0
      %p85 = por %p83, %p84
      %p86 = scmp.ne.s32.totalorder %s72, %s73
      %p87 = scmp.eq.s32.totalorder %s21, 1
      %p88 = por %p86, %p87
      %p90 = scmp.ne.s32.totalorder %s73, %s89
      %p91 = scmp.eq.s32.totalorder %s21, 0
      %p92 = por %p90, %p91
      %s94 = sadd.s32 %s93, 1
      %p97 = scmp.eq.s32.totalorder %s15, 1
      %p98 = scmp.ne.s32.totalorder %s93, %s95
      %p99 = scmp.eq.s32.totalorder %s15, 0
      %p100 = por %p98, %p99
      %p101 = scmp.ne.s32.totalorder %s93, %s95
      %p102 = scmp.eq.s32.totalorder %s20, 1
      %p103 = por %p101, %p102
      %p104 = scmp.ne.s32.totalorder %s95, %s96
      %p105 = scmp.eq.s32.totalorder %s20, 0
      %p106 = por %p104, %p105
      %p107 = scmp.ne.s32.totalorder %s95, %s96
      %p108 = scmp.eq.s32.totalorder %s21, 1
      %p109 = por %p107, %p108
      %p111 = scmp.ne.s32.totalorder %s96, %s110
      %p112 = scmp.eq.s32.totalorder %s21, 0
      %p113 = por %p111, %p112
      %s115 = sadd.s32 %s114, 1
      %p118 = scmp.eq.s32.totalorder %s15, 1
      %p119 = scmp.ne.s32.totalorder %s114, %s116
      %p120 = scmp.eq.s32.totalorder %s15, 0
      %p121 = por %p119, %p120
      %p122 = scmp.ne.s32.totalorder %s114, %s116
      %p123 = scmp.eq.s32.totalorder %s20, 1
      %p124 = por %p122, %p123
      %p125 = scmp.ne.s32.totalorder %s116, %s117
      %p126 = scmp.eq.s32.totalorder %s20, 0
      %p127 = por %p125, %p126
      %p128 = scmp.ne.s32.totalorder %s116, %s117
      %p129 = scmp.eq.s32.totalorder %s21, 1
      %p130 = por %p128, %p129
      %p132 = scmp.ne.s32.totalorder %s117, %s131
      %p133 = scmp.eq.s32.totalorder %s21, 0
      %p134 = por %p132, %p133
      %s136 = sadd.s32 %s135, 1
      %p139 = scmp.eq.s32.totalorder %s15, 1
      %p140 = scmp.ne.s32.totalorder %s135, %s137
      %p141 = scmp.eq.s32.totalorder %s15, 0
      %p142 = por %p140, %p141
      %p143 = scmp.ne.s32.totalorder %s135, %s137
      %p144 = scmp.eq.s32.totalorder %s20, 1
      %p145 = por %p143, %p144
      %p146 = scmp.ne.s32.totalorder %s137, %s138
      %p147 = scmp.eq.s32.totalorder %s20, 0
      %p148 = por %p146, %p147
      %p149 = scmp.ne.s32.totalorder %s137, %s138
      %p150 = scmp.eq.s32.totalorder %s21, 1
      %p151 = por %p149, %p150
      %p153 = scmp.ne.s32.totalorder %s138, %s152
      %p154 = scmp.eq.s32.totalorder %s21, 0
      %p155 = por %p153, %p154
      %s157 = sadd.s32 %s156, 1
      %p160 = scmp.eq.s32.totalorder %s15, 1
      %p161 = scmp.ne.s32.totalorder %s156, %s158
      %p162 = scmp.eq.s32.totalorder %s15, 0
      %p163 = por %p161, %p162
      %p164 = scmp.ne.s32.totalorder %s156, %s158
      %p165 = scmp.eq.s32.totalorder %s20, 1
      %p166 = por %p164, %p165
      %p167 = scmp.ne.s32.totalorder %s158, %s159
      %p168 = scmp.eq.s32.totalorder %s20, 0
      %p169 = por %p167, %p168
      %p170 = scmp.ne.s32.totalorder %s158, %s159
      %p171 = scmp.eq.s32.totalorder %s21, 1
      %p172 = por %p170, %p171
      %p174 = scmp.ne.s32.totalorder %s159, %s173
      %p175 = scmp.eq.s32.totalorder %s21, 0
      %p176 = por %p174, %p175
      %s177 = ssub.s32 %s22, %s34
      %s178 = ssub.s32 %s23, %s30
      %s179 = sor.u32 %s177, %s178
      %p180 = scmp.eq.s32.totalorder %s179, 0
      %s182 = sadd.s32 %s181, 1
      %s183 = scalar_select %p180, %s181, %s182
      %p186 = pneg %p180
      %p187 = scmp.eq.s32.totalorder %s15, 1
      %p188 = por %p186, %p187
      %p189 = scmp.ne.s32.totalorder %s181, %s184
      %p190 = scmp.eq.s32.totalorder %s15, 0
      %p191 = por %p189, %p190
      %p192 = scmp.ne.s32.totalorder %s181, %s184
      %p193 = scmp.eq.s32.totalorder %s20, 1
      %p194 = por %p192, %p193
      %p195 = scmp.ne.s32.totalorder %s184, %s185
      %p196 = scmp.eq.s32.totalorder %s20, 0
      %p197 = por %p195, %p196
      %p198 = scmp.ne.s32.totalorder %s184, %s185
      %p199 = scmp.eq.s32.totalorder %s21, 1
      %p200 = por %p198, %p199
      %p202 = scmp.ne.s32.totalorder %s185, %s201
      %p203 = scmp.eq.s32.totalorder %s21, 0
      %p204 = por %p202, %p203
      %p205 = scmp.le.s32.totalorder 1, %s15
      %p206 = scmp.lt.s32.totalorder %s15, 3
      %p207 = pnand %p205, %p206
      %p208 = pneg %p207
      // Predicated region
      $region9: #{multi_features_forward.1} parent=5 // pred_check
        _
      $region10: #{multi_features_forward.1} parent=5 // pred_check_branch
        %210 = sbr.rel (%p207) target = $region12
      $region11: #{multi_features_forward.1} parent=5 // pred_region
        %s211 = ssub.s32 %s15, 1
        // Predicated region
        $region13: #{multi_features_forward.1} parent=11 // pred_check
          %p212 = pneg %p106
        $region14: #{multi_features_forward.1} parent=11 // pred_check_branch
          %214 = sbr.rel (%p212) target = $region16
        $region15: #{multi_features_forward.1} parent=11 // pred_region
          _
        $region16: #{multi_features_forward.1} parent=11 // pred_fallthru
          _
        // Predicated region
        $region17: #{multi_features_forward.1} parent=11 // pred_check
          %p215 = pneg %p127
        $region18: #{multi_features_forward.1} parent=11 // pred_check_branch
          %217 = sbr.rel (%p215) target = $region20
        $region19: #{multi_features_forward.1} parent=11 // pred_region
          _
        $region20: #{multi_features_forward.1} parent=11 // pred_fallthru
          _
        // Predicated region
        $region21: #{multi_features_forward.1} parent=11 // pred_check
          %p218 = pneg %p148
        $region22: #{multi_features_forward.1} parent=11 // pred_check_branch
          %220 = sbr.rel (%p218) target = $region24
        $region23: #{multi_features_forward.1} parent=11 // pred_region
          _
        $region24: #{multi_features_forward.1} parent=11 // pred_fallthru
          _
        // Predicated region
        $region25: #{multi_features_forward.1} parent=11 // pred_check
          %p221 = pneg %p169
        $region26: #{multi_features_forward.1} parent=11 // pred_check_branch
          %223 = sbr.rel (%p221) target = $region28
        $region27: #{multi_features_forward.1} parent=11 // pred_region
          _
        $region28: #{multi_features_forward.1} parent=11 // pred_fallthru
          _
      $region12: #{multi_features_forward.1} parent=5 // pred_fallthru
        _
      %p224 = scmp.lt.s32.totalorder %s15, 2
      // Predicated region
      $region29: #{multi_features_forward.1} parent=5 // pred_check
        %p225 = pneg %p224
      $region30: #{multi_features_forward.1} parent=5 // pred_check_branch
        %227 = sbr.rel (%p225) target = $region32
      $region31: #{multi_features_forward.1} parent=5 // pred_region
        // Predicated region
        $region33: #{multi_features_forward.1} parent=31 // pred_check
          %p228 = pneg %p49
        $region34: #{multi_features_forward.1} parent=31 // pred_check_branch
          %230 = sbr.rel (%p228) target = $region36
        $region35: #{multi_features_forward.1} parent=31 // pred_region
          %s231 = smul.u32 2, %s23
          %p232 = scmp.lt.s32.totalorder %s22, 1
          %s233 = scalar_select %p232, %s22, 1
          %p234 = scmp.lt.s32.totalorder %s231, 3
          %s235 = scalar_select %p234, %s231, 3
          %s236 = smul.addr %s233, 4
          %s237 = sadd.s32 %s235, %s236
          %s238 = smul.addr %s237, 4
          %s239 = scalar_lea.vmem %s0, %s238
          %s240 = smul.u32 2, %s23
        $region36: #{multi_features_forward.1} parent=31 // pred_fallthru
          _
        // Predicated region
        $region37: #{multi_features_forward.1} parent=31 // pred_check
          %p241 = pneg %p79
        $region38: #{multi_features_forward.1} parent=31 // pred_check_branch
          %243 = sbr.rel (%p241) target = $region40
        $region39: #{multi_features_forward.1} parent=31 // pred_region
          %s244 = sadd.s32 %s23, 1
          %s245 = smul.u32 2, %s244
          %p246 = scmp.lt.s32.totalorder %s22, 1
          %s247 = scalar_select %p246, %s22, 1
          %p248 = scmp.lt.s32.totalorder %s245, 3
          %s249 = scalar_select %p248, %s245, 3
          %s250 = smul.addr %s247, 4
          %s251 = sadd.s32 %s249, %s250
          %s252 = smul.addr %s251, 4
          %s253 = scalar_lea.vmem %s1, %s252
          %s254 = sadd.s32 %s23, 1
          %s255 = smul.u32 2, %s254
        $region40: #{multi_features_forward.1} parent=31 // pred_fallthru
          _
      $region32: #{multi_features_forward.1} parent=5 // pred_fallthru
        _
      %p256 = scmp.le.s32.totalorder 1, %s15
      %p257 = scmp.lt.s32.totalorder %s15, 3
      %p258 = pnand %p256, %p257
      %p259 = pneg %p258
      // Predicated region
      $region41: #{multi_features_forward.1} parent=5 // pred_check
        _
      $region42: #{multi_features_forward.1} parent=5 // pred_check_branch
        %261 = sbr.rel (%p258) target = $region44
      $region43: #{multi_features_forward.1} parent=5 // pred_region
        %s262 = ssub.s32 %s15, 1
        %s263 = smul.u32 2, %s25
        %p264 = scmp.lt.s32.totalorder %s24, 1
        %s265 = scalar_select %p264, %s24, 1
        %p266 = scmp.lt.s32.totalorder %s263, 3
        %s267 = scalar_select %p266, %s263, 3
        %s268 = smul.addr %s265, 4
        %s269 = sadd.s32 %s267, %s268
        %s270 = smul.addr %s269, 4
        %s271 = scalar_lea.vmem %s0, %s270
        %p272 = pneg %p55
        %p273 = pneg %p52
        %s274 = sadd.s32 %s25, 1
        %s275 = smul.u32 2, %s274
        %p276 = scmp.lt.s32.totalorder %s24, 1
        %s277 = scalar_select %p276, %s24, 1
        %p278 = scmp.lt.s32.totalorder %s275, 3
        %s279 = scalar_select %p278, %s275, 3
        %s280 = smul.addr %s277, 4
        %s281 = sadd.s32 %s279, %s280
        %s282 = smul.addr %s281, 4
        %s283 = scalar_lea.vmem %s1, %s282
        %p284 = pneg %p85
        %p285 = pneg %p82
        %p286 = pneg %p106
        %p287 = pneg %p103
        %p288 = pneg %p127
        %p289 = pneg %p124
        %p290 = pneg %p148
        %p291 = pneg %p145
        %p292 = pneg %p169
        %p293 = pneg %p166
        %p294 = pneg %p197
        %p295 = pneg %p194
        %s296 = sand.u32 %s184, 1
        %s297 = scalar_lea.sflag [#allocation4], %s296
        %s298 = sand.u32 %s184, 1
        %s299 = smul.addr %s298, 16
        %s300 = scalar_lea.vmem [#allocation3], %s299
        %s301 = smul.u32 2, %s25
        %p302 = scmp.lt.s32.totalorder %s24, 1
        %s303 = scalar_select %p302, %s24, 1
        %p304 = scmp.lt.s32.totalorder %s301, 3
        %s305 = scalar_select %p304, %s301, 3
        %s306 = smul.addr %s303, 4
        %s307 = sadd.s32 %s305, %s306
        %s308 = smul.addr %s307, 4
        %s309 = scalar_lea.vmem %s0, %s308
        %s310 = smul.u32 2, %s25
        %s311 = sadd.s32 %s25, 1
        %s312 = smul.u32 2, %s311
        %p313 = scmp.lt.s32.totalorder %s24, 1
        %s314 = scalar_select %p313, %s24, 1
        %p315 = scmp.lt.s32.totalorder %s312, 3
        %s316 = scalar_select %p315, %s312, 3
        %s317 = smul.addr %s314, 4
        %s318 = sadd.s32 %s316, %s317
        %s319 = smul.addr %s318, 4
        %s320 = scalar_lea.vmem %s1, %s319
        %s321 = sadd.s32 %s25, 1
        %s322 = smul.u32 2, %s321
        %s323 = smul.u32 2, %s25
        %v325 = vld [vmem:[%s309] sm:$0xf]
        %v326 = vld [vmem:[%s309 + $0x4] sm:$0xf]
        %v327 = vunpack.c.l.bf16 %v325
        %v328 = vunpack.c.l.bf16 %v326
        %vm329 = vcmask 523264
        %330 = vst.msk [vmem:[#allocation2] sm:$0xff] %vm329, %v327
        %331 = vst.msk [vmem:[#allocation2 + $0x8] sm:$0xff] %vm329, %v328
        %v332 = vld [vmem:[%s320] sm:$0xf]
        %v333 = vld [vmem:[%s320 + $0x4] sm:$0xf]
        %v334 = vunpack.c.l.bf16 %v332
        %v335 = vunpack.c.l.bf16 %v333
        %336 = vst.msk [vmem:[#allocation2 + $0x10] sm:$0xff] %vm329, %v334
        %337 = vst.msk [vmem:[#allocation2 + $0x18] sm:$0xff] %vm329, %v335
        %v338 = vld [vmem:[#allocation2 + $0x4] sm:$0xff]
        %v339 = vld [vmem:[#allocation2 + $0xc] sm:$0xff]
        %v340 = vpack.c.bf16 %v339, %v338
        %v341 = vld [vmem:[%s2] sm:$0xf]
        %v342 = vld [vmem:[%s2 + $0x4] sm:$0xf]
        %v343 = vld [vmem:[%s2 + $0x8] sm:$0xf]
        %v344 = vld [vmem:[%s2 + $0xc] sm:$0xf]
        %v345 = vld [vmem:[%s2 + $0x10] sm:$0xf]
        %v346 = vld [vmem:[%s2 + $0x14] sm:$0xf]
        %v347 = vld [vmem:[%s2 + $0x18] sm:$0xf]
        %v348 = vld [vmem:[%s2 + $0x1c] sm:$0xf]
        %v349 = vld [vmem:[#allocation2 + $0x5] sm:$0xff]
        %v350 = vld [vmem:[#allocation2 + $0xd] sm:$0xff]
        %v351 = vpack.c.bf16 %v350, %v349
        %s352 = scalar_lea.vmem %s2, 32
        %v353 = vld [vmem:[%s352] sm:$0xf]
        %v354 = vld [vmem:[%s352 + $0x4] sm:$0xf]
        %v355 = vld [vmem:[%s352 + $0x8] sm:$0xf]
        %v356 = vld [vmem:[%s352 + $0xc] sm:$0xf]
        %v357 = vld [vmem:[%s352 + $0x10] sm:$0xf]
        %v358 = vld [vmem:[%s352 + $0x14] sm:$0xf]
        %v359 = vld [vmem:[%s352 + $0x18] sm:$0xf]
        %v360 = vld [vmem:[%s352 + $0x1c] sm:$0xf]
        %v369 = vunpack.c.l.b16 %v353
        %v370 = vunpack.c.l.b16 %v354
        %v371 = vunpack.c.l.b16 %v355
        %v372 = vunpack.c.l.b16 %v356
        %v373 = vunpack.c.l.b16 %v357
        %v374 = vunpack.c.l.b16 %v358
        %v375 = vunpack.c.l.b16 %v359
        %v376 = vunpack.c.l.b16 %v360
        %v377 = vpack.c.b16 %v370, %v369
        %v378 = vpack.c.b16 %v372, %v371
        %v379 = vpack.c.b16 %v374, %v373
        %v380 = vpack.c.b16 %v376, %v375
        %v386 = vsel %vm329, %v351, 0
        %388 = vmatprep.subr.bf16.mxu0 0
        %389 = vmatpush1.bf16.msra.mxu0 0
        %390 = vmatprep.subr.bf16.mxu0 0
        %391 = vmatpush1.bf16.msra.mxu0 0
        %392 = vmatprep.subr.bf16.mxu0 0
        %393 = vmatpush1.bf16.msra.mxu0 0
        %394 = vmatprep.subr.bf16.mxu0 0
        %395 = vmatpush1.bf16.msra.mxu0 0
        %396 = vmatprep.subr.bf16.mxu0 0
        %397 = vmatpush1.bf16.msra.mxu0 %v380
        %398 = vmatprep.subr.bf16.mxu0 0
        %399 = vmatpush1.bf16.msra.mxu0 %v379
        %400 = vmatprep.subr.bf16.mxu0 0
        %401 = vmatpush1.bf16.msra.mxu0 %v378
        %402 = vmatprep.subr.bf16.mxu0 0
        %403 = vmatpush1.bf16.msra.mxu0 %v377
        %404 = vmatprep.subr.bf16.mxu0 0
        %405 = vmatpush2.bf16.msra.mxu0 0
        %406 = vmatprep.subr.bf16.mxu0 0
        %407 = vmatpush2.bf16.msra.mxu0 0
        %408 = vmatprep.subr.bf16.mxu0 0
        %409 = vmatpush2.bf16.msra.mxu0 0
        %410 = vmatprep.subr.bf16.mxu0 0
        %411 = vmatpush2.bf16.msra.mxu0 0
        %412 = vmatprep.subr.bf16.mxu0 0
        %413 = vmatpush2.bf16.msra.mxu0 0
        %414 = vmatprep.subr.bf16.mxu0 0
        %415 = vmatpush2.bf16.msra.mxu0 0
        %416 = vmatprep.subr.bf16.mxu0 0
        %417 = vmatpush2.bf16.msra.mxu0 0
        %418 = vmatprep.subr.bf16.mxu0 0
        %419 = vmatpush2.bf16.msra.mxu0 0
        %420 = vmatprep.mubr.bf16.mxu0 0
        %421 = vmatmul.mubr.bf16.gmra.mxu0 %v386
        %v422 = vpop.f32.mrf.mxu0
        %v423 = vadd.f32 0.0, %v422
        %v424 = vpop.f32.mrf.mxu0
        %v425 = vpop.f32.mrf.mxu0
        %v426 = vadd.f32 0.0, %v425
        %v427 = vpop.f32.mrf.mxu0
        %428 = vdwg.mxu0
        %v437 = vunpack.c.l.b16 %v341
        %v438 = vunpack.c.l.b16 %v342
        %v439 = vunpack.c.l.b16 %v343
        %v440 = vunpack.c.l.b16 %v344
        %v441 = vunpack.c.l.b16 %v345
        %v442 = vunpack.c.l.b16 %v346
        %v443 = vunpack.c.l.b16 %v347
        %v444 = vunpack.c.l.b16 %v348
        %v445 = vpack.c.b16 %v438, %v437
        %v446 = vpack.c.b16 %v440, %v439
        %v447 = vpack.c.b16 %v442, %v441
        %v448 = vpack.c.b16 %v444, %v443
        %v454 = vsel %vm329, %v340, 0
        %456 = vmatprep.subr.bf16.mxu0 0
        %457 = vmatpush1.bf16.msra.mxu0 0
        %458 = vmatprep.subr.bf16.mxu0 0
        %459 = vmatpush1.bf16.msra.mxu0 0
        %460 = vmatprep.subr.bf16.mxu0 0
        %461 = vmatpush1.bf16.msra.mxu0 0
        %462 = vmatprep.subr.bf16.mxu0 0
        %463 = vmatpush1.bf16.msra.mxu0 0
        %464 = vmatprep.subr.bf16.mxu0 0
        %465 = vmatpush1.bf16.msra.mxu0 %v448
        %466 = vmatprep.subr.bf16.mxu0 0
        %467 = vmatpush1.bf16.msra.mxu0 %v447
        %468 = vmatprep.subr.bf16.mxu0 0
        %469 = vmatpush1.bf16.msra.mxu0 %v446
        %470 = vmatprep.subr.bf16.mxu0 0
        %471 = vmatpush1.bf16.msra.mxu0 %v445
        %472 = vmatprep.subr.bf16.mxu0 0
        %473 = vmatpush2.bf16.msra.mxu0 0
        %474 = vmatprep.subr.bf16.mxu0 0
        %475 = vmatpush2.bf16.msra.mxu0 0
        %476 = vmatprep.subr.bf16.mxu0 0
        %477 = vmatpush2.bf16.msra.mxu0 0
        %478 = vmatprep.subr.bf16.mxu0 0
        %479 = vmatpush2.bf16.msra.mxu0 0
        %480 = vmatprep.subr.bf16.mxu0 0
        %481 = vmatpush2.bf16.msra.mxu0 0
        %482 = vmatprep.subr.bf16.mxu0 0
        %483 = vmatpush2.bf16.msra.mxu0 0
        %484 = vmatprep.subr.bf16.mxu0 0
        %485 = vmatpush2.bf16.msra.mxu0 0
        %486 = vmatprep.subr.bf16.mxu0 0
        %487 = vmatpush2.bf16.msra.mxu0 0
        %488 = vmatprep.mubr.bf16.mxu0 0
        %489 = vmatmul.mubr.bf16.gmra.mxu0 %v454
        %v490 = vpop.f32.mrf.mxu0
        %v491 = vadd.f32 %v423, %v490
        %v492 = vpop.f32.mrf.mxu0
        %v493 = vpop.f32.mrf.mxu0
        %v494 = vadd.f32 %v426, %v493
        %v495 = vpop.f32.mrf.mxu0
        %496 = vdwg.mxu0
        %v497 = vld [vmem:[#allocation2 + $0x6] sm:$0xff]
        %v498 = vld [vmem:[#allocation2 + $0xe] sm:$0xff]
        %v499 = vpack.c.bf16 %v498, %v497
        %s500 = scalar_lea.vmem %s2, 64
        %v501 = vld [vmem:[%s500] sm:$0xf]
        %v502 = vld [vmem:[%s500 + $0x4] sm:$0xf]
        %v503 = vld [vmem:[%s500 + $0x8] sm:$0xf]
        %v504 = vld [vmem:[%s500 + $0xc] sm:$0xf]
        %v505 = vld [vmem:[%s500 + $0x10] sm:$0xf]
        %v506 = vld [vmem:[%s500 + $0x14] sm:$0xf]
        %v507 = vld [vmem:[%s500 + $0x18] sm:$0xf]
        %v508 = vld [vmem:[%s500 + $0x1c] sm:$0xf]
        %v517 = vunpack.c.l.b16 %v501
        %v518 = vunpack.c.l.b16 %v502
        %v519 = vunpack.c.l.b16 %v503
        %v520 = vunpack.c.l.b16 %v504
        %v521 = vunpack.c.l.b16 %v505
        %v522 = vunpack.c.l.b16 %v506
        %v523 = vunpack.c.l.b16 %v507
        %v524 = vunpack.c.l.b16 %v508
        %v525 = vpack.c.b16 %v518, %v517
        %v526 = vpack.c.b16 %v520, %v519
        %v527 = vpack.c.b16 %v522, %v521
        %v528 = vpack.c.b16 %v524, %v523
        %v534 = vsel %vm329, %v499, 0
        %536 = vmatprep.subr.bf16.mxu0 0
        %537 = vmatpush1.bf16.msra.mxu0 0
        %538 = vmatprep.subr.bf16.mxu0 0
        %539 = vmatpush1.bf16.msra.mxu0 0
        %540 = vmatprep.subr.bf16.mxu0 0
        %541 = vmatpush1.bf16.msra.mxu0 0
        %542 = vmatprep.subr.bf16.mxu0 0
        %543 = vmatpush1.bf16.msra.mxu0 0
        %544 = vmatprep.subr.bf16.mxu0 0
        %545 = vmatpush1.bf16.msra.mxu0 %v528
        %546 = vmatprep.subr.bf16.mxu0 0
        %547 = vmatpush1.bf16.msra.mxu0 %v527
        %548 = vmatprep.subr.bf16.mxu0 0
        %549 = vmatpush1.bf16.msra.mxu0 %v526
        %550 = vmatprep.subr.bf16.mxu0 0
        %551 = vmatpush1.bf16.msra.mxu0 %v525
        %552 = vmatprep.subr.bf16.mxu0 0
        %553 = vmatpush2.bf16.msra.mxu0 0
        %554 = vmatprep.subr.bf16.mxu0 0
        %555 = vmatpush2.bf16.msra.mxu0 0
        %556 = vmatprep.subr.bf16.mxu0 0
        %557 = vmatpush2.bf16.msra.mxu0 0
        %558 = vmatprep.subr.bf16.mxu0 0
        %559 = vmatpush2.bf16.msra.mxu0 0
        %560 = vmatprep.subr.bf16.mxu0 0
        %561 = vmatpush2.bf16.msra.mxu0 0
        %562 = vmatprep.subr.bf16.mxu0 0
        %563 = vmatpush2.bf16.msra.mxu0 0
        %564 = vmatprep.subr.bf16.mxu0 0
        %565 = vmatpush2.bf16.msra.mxu0 0
        %566 = vmatprep.subr.bf16.mxu0 0
        %567 = vmatpush2.bf16.msra.mxu0 0
        %568 = vmatprep.mubr.bf16.mxu0 0
        %569 = vmatmul.mubr.bf16.gmra.mxu0 %v534
        %v570 = vpop.f32.mrf.mxu0
        %v571 = vadd.f32 0.0, %v570
        %v572 = vpop.f32.mrf.mxu0
        %v573 = vpop.f32.mrf.mxu0
        %v574 = vadd.f32 0.0, %v573
        %v575 = vpop.f32.mrf.mxu0
        %576 = vdwg.mxu0
        %v577 = vadd.f32 %v491, %v571
        %v578 = vadd.f32 %v494, %v574
        %v579 = vld [vmem:[#allocation2 + $0x7] sm:$0xff]
        %v580 = vld [vmem:[#allocation2 + $0xf] sm:$0xff]
        %v581 = vpack.c.bf16 %v580, %v579
        %s582 = scalar_lea.vmem %s2, 96
        %v583 = vld [vmem:[%s582] sm:$0xf]
        %v584 = vld [vmem:[%s582 + $0x4] sm:$0xf]
        %v585 = vld [vmem:[%s582 + $0x8] sm:$0xf]
        %v586 = vld [vmem:[%s582 + $0xc] sm:$0xf]
        %v587 = vld [vmem:[%s582 + $0x10] sm:$0xf]
        %v588 = vld [vmem:[%s582 + $0x14] sm:$0xf]
        %v589 = vld [vmem:[%s582 + $0x18] sm:$0xf]
        %v590 = vld [vmem:[%s582 + $0x1c] sm:$0xf]
        %v599 = vunpack.c.l.b16 %v583
        %v600 = vunpack.c.l.b16 %v584
        %v601 = vunpack.c.l.b16 %v585
        %v602 = vunpack.c.l.b16 %v586
        %v603 = vunpack.c.l.b16 %v587
        %v604 = vunpack.c.l.b16 %v588
        %v605 = vunpack.c.l.b16 %v589
        %v606 = vunpack.c.l.b16 %v590
        %v607 = vpack.c.b16 %v600, %v599
        %v608 = vpack.c.b16 %v602, %v601
        %v609 = vpack.c.b16 %v604, %v603
        %v610 = vpack.c.b16 %v606, %v605
        %v616 = vsel %vm329, %v581, 0
        %618 = vmatprep.subr.bf16.mxu0 0
        %619 = vmatpush1.bf16.msra.mxu0 0
        %620 = vmatprep.subr.bf16.mxu0 0
        %621 = vmatpush1.bf16.msra.mxu0 0
        %622 = vmatprep.subr.bf16.mxu0 0
        %623 = vmatpush1.bf16.msra.mxu0 0
        %624 = vmatprep.subr.bf16.mxu0 0
        %625 = vmatpush1.bf16.msra.mxu0 0
        %626 = vmatprep.subr.bf16.mxu0 0
        %627 = vmatpush1.bf16.msra.mxu0 %v610
        %628 = vmatprep.subr.bf16.mxu0 0
        %629 = vmatpush1.bf16.msra.mxu0 %v609
        %630 = vmatprep.subr.bf16.mxu0 0
        %631 = vmatpush1.bf16.msra.mxu0 %v608
        %632 = vmatprep.subr.bf16.mxu0 0
        %633 = vmatpush1.bf16.msra.mxu0 %v607
        %634 = vmatprep.subr.bf16.mxu0 0
        %635 = vmatpush2.bf16.msra.mxu0 0
        %636 = vmatprep.subr.bf16.mxu0 0
        %637 = vmatpush2.bf16.msra.mxu0 0
        %638 = vmatprep.subr.bf16.mxu0 0
        %639 = vmatpush2.bf16.msra.mxu0 0
        %640 = vmatprep.subr.bf16.mxu0 0
        %641 = vmatpush2.bf16.msra.mxu0 0
        %642 = vmatprep.subr.bf16.mxu0 0
        %643 = vmatpush2.bf16.msra.mxu0 0
        %644 = vmatprep.subr.bf16.mxu0 0
        %645 = vmatpush2.bf16.msra.mxu0 0
        %646 = vmatprep.subr.bf16.mxu0 0
        %647 = vmatpush2.bf16.msra.mxu0 0
        %648 = vmatprep.subr.bf16.mxu0 0
        %649 = vmatpush2.bf16.msra.mxu0 0
        %650 = vmatprep.mubr.bf16.mxu0 0
        %651 = vmatmul.mubr.bf16.gmra.mxu0 %v616
        %v652 = vpop.f32.mrf.mxu0
        %v653 = vadd.f32 0.0, %v652
        %v654 = vpop.f32.mrf.mxu0
        %v655 = vpop.f32.mrf.mxu0
        %v656 = vadd.f32 0.0, %v655
        %v657 = vpop.f32.mrf.mxu0
        %658 = vdwg.mxu0
        %v659 = vadd.f32 %v577, %v653
        %v660 = vadd.f32 %v578, %v656
        %v661 = vld [vmem:[#allocation2 + $0x8] sm:$0xff]
        %v662 = vld [vmem:[#allocation2 + $0x10] sm:$0xff]
        %v663 = vpack.c.bf16 %v662, %v661
        %s664 = scalar_lea.vmem %s2, 128
        %v665 = vld [vmem:[%s664] sm:$0xf]
        %v666 = vld [vmem:[%s664 + $0x4] sm:$0xf]
        %v667 = vld [vmem:[%s664 + $0x8] sm:$0xf]
        %v668 = vld [vmem:[%s664 + $0xc] sm:$0xf]
        %v669 = vld [vmem:[%s664 + $0x10] sm:$0xf]
        %v670 = vld [vmem:[%s664 + $0x14] sm:$0xf]
        %v671 = vld [vmem:[%s664 + $0x18] sm:$0xf]
        %v672 = vld [vmem:[%s664 + $0x1c] sm:$0xf]
        %v681 = vunpack.c.l.b16 %v665
        %v682 = vunpack.c.l.b16 %v666
        %v683 = vunpack.c.l.b16 %v667
        %v684 = vunpack.c.l.b16 %v668
        %v685 = vunpack.c.l.b16 %v669
        %v686 = vunpack.c.l.b16 %v670
        %v687 = vunpack.c.l.b16 %v671
        %v688 = vunpack.c.l.b16 %v672
        %v689 = vpack.c.b16 %v682, %v681
        %v690 = vpack.c.b16 %v684, %v683
        %v691 = vpack.c.b16 %v686, %v685
        %v692 = vpack.c.b16 %v688, %v687
        %v698 = vsel %vm329, %v663, 0
        %700 = vmatprep.subr.bf16.mxu0 0
        %701 = vmatpush1.bf16.msra.mxu0 0
        %702 = vmatprep.subr.bf16.mxu0 0
        %703 = vmatpush1.bf16.msra.mxu0 0
        %704 = vmatprep.subr.bf16.mxu0 0
        %705 = vmatpush1.bf16.msra.mxu0 0
        %706 = vmatprep.subr.bf16.mxu0 0
        %707 = vmatpush1.bf16.msra.mxu0 0
        %708 = vmatprep.subr.bf16.mxu0 0
        %709 = vmatpush1.bf16.msra.mxu0 %v692
        %710 = vmatprep.subr.bf16.mxu0 0
        %711 = vmatpush1.bf16.msra.mxu0 %v691
        %712 = vmatprep.subr.bf16.mxu0 0
        %713 = vmatpush1.bf16.msra.mxu0 %v690
        %714 = vmatprep.subr.bf16.mxu0 0
        %715 = vmatpush1.bf16.msra.mxu0 %v689
        %716 = vmatprep.subr.bf16.mxu0 0
        %717 = vmatpush2.bf16.msra.mxu0 0
        %718 = vmatprep.subr.bf16.mxu0 0
        %719 = vmatpush2.bf16.msra.mxu0 0
        %720 = vmatprep.subr.bf16.mxu0 0
        %721 = vmatpush2.bf16.msra.mxu0 0
        %722 = vmatprep.subr.bf16.mxu0 0
        %723 = vmatpush2.bf16.msra.mxu0 0
        %724 = vmatprep.subr.bf16.mxu0 0
        %725 = vmatpush2.bf16.msra.mxu0 0
        %726 = vmatprep.subr.bf16.mxu0 0
        %727 = vmatpush2.bf16.msra.mxu0 0
        %728 = vmatprep.subr.bf16.mxu0 0
        %729 = vmatpush2.bf16.msra.mxu0 0
        %730 = vmatprep.subr.bf16.mxu0 0
        %731 = vmatpush2.bf16.msra.mxu0 0
        %732 = vmatprep.mubr.bf16.mxu0 0
        %733 = vmatmul.mubr.bf16.gmra.mxu0 %v698
        %v734 = vpop.f32.mrf.mxu0
        %v735 = vadd.f32 0.0, %v734
        %v736 = vpop.f32.mrf.mxu0
        %v737 = vpop.f32.mrf.mxu0
        %v738 = vadd.f32 0.0, %v737
        %v739 = vpop.f32.mrf.mxu0
        %740 = vdwg.mxu0
        %v741 = vadd.f32 %v659, %v735
        %v742 = vadd.f32 %v660, %v738
        %v743 = vld [vmem:[#allocation2 + $0x9] sm:$0xff]
        %v744 = vld [vmem:[#allocation2 + $0x11] sm:$0xff]
        %v745 = vpack.c.bf16 %v744, %v743
        %s746 = scalar_lea.vmem %s2, 160
        %v747 = vld [vmem:[%s746] sm:$0xf]
        %v748 = vld [vmem:[%s746 + $0x4] sm:$0xf]
        %v749 = vld [vmem:[%s746 + $0x8] sm:$0xf]
        %v750 = vld [vmem:[%s746 + $0xc] sm:$0xf]
        %v751 = vld [vmem:[%s746 + $0x10] sm:$0xf]
        %v752 = vld [vmem:[%s746 + $0x14] sm:$0xf]
        %v753 = vld [vmem:[%s746 + $0x18] sm:$0xf]
        %v754 = vld [vmem:[%s746 + $0x1c] sm:$0xf]
        %v763 = vunpack.c.l.b16 %v747
        %v764 = vunpack.c.l.b16 %v748
        %v765 = vunpack.c.l.b16 %v749
        %v766 = vunpack.c.l.b16 %v750
        %v767 = vunpack.c.l.b16 %v751
        %v768 = vunpack.c.l.b16 %v752
        %v769 = vunpack.c.l.b16 %v753
        %v770 = vunpack.c.l.b16 %v754
        %v771 = vpack.c.b16 %v764, %v763
        %v772 = vpack.c.b16 %v766, %v765
        %v773 = vpack.c.b16 %v768, %v767
        %v774 = vpack.c.b16 %v770, %v769
        %v780 = vsel %vm329, %v745, 0
        %782 = vmatprep.subr.bf16.mxu0 0
        %783 = vmatpush1.bf16.msra.mxu0 0
        %784 = vmatprep.subr.bf16.mxu0 0
        %785 = vmatpush1.bf16.msra.mxu0 0
        %786 = vmatprep.subr.bf16.mxu0 0
        %787 = vmatpush1.bf16.msra.mxu0 0
        %788 = vmatprep.subr.bf16.mxu0 0
        %789 = vmatpush1.bf16.msra.mxu0 0
        %790 = vmatprep.subr.bf16.mxu0 0
        %791 = vmatpush1.bf16.msra.mxu0 %v774
        %792 = vmatprep.subr.bf16.mxu0 0
        %793 = vmatpush1.bf16.msra.mxu0 %v773
        %794 = vmatprep.subr.bf16.mxu0 0
        %795 = vmatpush1.bf16.msra.mxu0 %v772
        %796 = vmatprep.subr.bf16.mxu0 0
        %797 = vmatpush1.bf16.msra.mxu0 %v771
        %798 = vmatprep.subr.bf16.mxu0 0
        %799 = vmatpush2.bf16.msra.mxu0 0
        %800 = vmatprep.subr.bf16.mxu0 0
        %801 = vmatpush2.bf16.msra.mxu0 0
        %802 = vmatprep.subr.bf16.mxu0 0
        %803 = vmatpush2.bf16.msra.mxu0 0
        %804 = vmatprep.subr.bf16.mxu0 0
        %805 = vmatpush2.bf16.msra.mxu0 0
        %806 = vmatprep.subr.bf16.mxu0 0
        %807 = vmatpush2.bf16.msra.mxu0 0
        %808 = vmatprep.subr.bf16.mxu0 0
        %809 = vmatpush2.bf16.msra.mxu0 0
        %810 = vmatprep.subr.bf16.mxu0 0
        %811 = vmatpush2.bf16.msra.mxu0 0
        %812 = vmatprep.subr.bf16.mxu0 0
        %813 = vmatpush2.bf16.msra.mxu0 0
        %814 = vmatprep.mubr.bf16.mxu0 0
        %815 = vmatmul.mubr.bf16.gmra.mxu0 %v780
        %v816 = vpop.f32.mrf.mxu0
        %v817 = vadd.f32 0.0, %v816
        %v818 = vpop.f32.mrf.mxu0
        %v819 = vpop.f32.mrf.mxu0
        %v820 = vadd.f32 0.0, %v819
        %v821 = vpop.f32.mrf.mxu0
        %822 = vdwg.mxu0
        %v823 = vadd.f32 %v741, %v817
        %v824 = vadd.f32 %v742, %v820
        %v825 = vld [vmem:[#allocation2 + $0xa] sm:$0xff]
        %v826 = vld [vmem:[#allocation2 + $0x12] sm:$0xff]
        %v827 = vpack.c.bf16 %v826, %v825
        %s828 = scalar_lea.vmem %s2, 192
        %v829 = vld [vmem:[%s828] sm:$0xf]
        %v830 = vld [vmem:[%s828 + $0x4] sm:$0xf]
        %v831 = vld [vmem:[%s828 + $0x8] sm:$0xf]
        %v832 = vld [vmem:[%s828 + $0xc] sm:$0xf]
        %v833 = vld [vmem:[%s828 + $0x10] sm:$0xf]
        %v834 = vld [vmem:[%s828 + $0x14] sm:$0xf]
        %v835 = vld [vmem:[%s828 + $0x18] sm:$0xf]
        %v836 = vld [vmem:[%s828 + $0x1c] sm:$0xf]
        %v845 = vunpack.c.l.b16 %v829
        %v846 = vunpack.c.l.b16 %v830
        %v847 = vunpack.c.l.b16 %v831
        %v848 = vunpack.c.l.b16 %v832
        %v849 = vunpack.c.l.b16 %v833
        %v850 = vunpack.c.l.b16 %v834
        %v851 = vunpack.c.l.b16 %v835
        %v852 = vunpack.c.l.b16 %v836
        %v853 = vpack.c.b16 %v846, %v845
        %v854 = vpack.c.b16 %v848, %v847
        %v855 = vpack.c.b16 %v850, %v849
        %v856 = vpack.c.b16 %v852, %v851
        %v862 = vsel %vm329, %v827, 0
        %864 = vmatprep.subr.bf16.mxu0 0
        %865 = vmatpush1.bf16.msra.mxu0 0
        %866 = vmatprep.subr.bf16.mxu0 0
        %867 = vmatpush1.bf16.msra.mxu0 0
        %868 = vmatprep.subr.bf16.mxu0 0
        %869 = vmatpush1.bf16.msra.mxu0 0
        %870 = vmatprep.subr.bf16.mxu0 0
        %871 = vmatpush1.bf16.msra.mxu0 0
        %872 = vmatprep.subr.bf16.mxu0 0
        %873 = vmatpush1.bf16.msra.mxu0 %v856
        %874 = vmatprep.subr.bf16.mxu0 0
        %875 = vmatpush1.bf16.msra.mxu0 %v855
        %876 = vmatprep.subr.bf16.mxu0 0
        %877 = vmatpush1.bf16.msra.mxu0 %v854
        %878 = vmatprep.subr.bf16.mxu0 0
        %879 = vmatpush1.bf16.msra.mxu0 %v853
        %880 = vmatprep.subr.bf16.mxu0 0
        %881 = vmatpush2.bf16.msra.mxu0 0
        %882 = vmatprep.subr.bf16.mxu0 0
        %883 = vmatpush2.bf16.msra.mxu0 0
        %884 = vmatprep.subr.bf16.mxu0 0
        %885 = vmatpush2.bf16.msra.mxu0 0
        %886 = vmatprep.subr.bf16.mxu0 0
        %887 = vmatpush2.bf16.msra.mxu0 0
        %888 = vmatprep.subr.bf16.mxu0 0
        %889 = vmatpush2.bf16.msra.mxu0 0
        %890 = vmatprep.subr.bf16.mxu0 0
        %891 = vmatpush2.bf16.msra.mxu0 0
        %892 = vmatprep.subr.bf16.mxu0 0
        %893 = vmatpush2.bf16.msra.mxu0 0
        %894 = vmatprep.subr.bf16.mxu0 0
        %895 = vmatpush2.bf16.msra.mxu0 0
        %896 = vmatprep.mubr.bf16.mxu0 0
        %897 = vmatmul.mubr.bf16.gmra.mxu0 %v862
        %v898 = vpop.f32.mrf.mxu0
        %v899 = vadd.f32 0.0, %v898
        %v900 = vpop.f32.mrf.mxu0
        %v901 = vpop.f32.mrf.mxu0
        %v902 = vadd.f32 0.0, %v901
        %v903 = vpop.f32.mrf.mxu0
        %904 = vdwg.mxu0
        %v905 = vadd.f32 %v823, %v899
        %v906 = vadd.f32 %v824, %v902
        %v907 = vld [vmem:[#allocation2 + $0xb] sm:$0xff]
        %v908 = vld [vmem:[#allocation2 + $0x13] sm:$0xff]
        %v909 = vpack.c.bf16 %v908, %v907
        %s910 = scalar_lea.vmem %s2, 224
        %v911 = vld [vmem:[%s910] sm:$0xf]
        %v912 = vld [vmem:[%s910 + $0x4] sm:$0xf]
        %v913 = vld [vmem:[%s910 + $0x8] sm:$0xf]
        %v914 = vld [vmem:[%s910 + $0xc] sm:$0xf]
        %v915 = vld [vmem:[%s910 + $0x10] sm:$0xf]
        %v916 = vld [vmem:[%s910 + $0x14] sm:$0xf]
        %v917 = vld [vmem:[%s910 + $0x18] sm:$0xf]
        %v918 = vld [vmem:[%s910 + $0x1c] sm:$0xf]
        %v927 = vunpack.c.l.b16 %v911
        %v928 = vunpack.c.l.b16 %v912
        %v929 = vunpack.c.l.b16 %v913
        %v930 = vunpack.c.l.b16 %v914
        %v931 = vunpack.c.l.b16 %v915
        %v932 = vunpack.c.l.b16 %v916
        %v933 = vunpack.c.l.b16 %v917
        %v934 = vunpack.c.l.b16 %v918
        %v935 = vpack.c.b16 %v928, %v927
        %v936 = vpack.c.b16 %v930, %v929
        %v937 = vpack.c.b16 %v932, %v931
        %v938 = vpack.c.b16 %v934, %v933
        %v944 = vsel %vm329, %v909, 0
        %946 = vmatprep.subr.bf16.mxu0 0
        %947 = vmatpush1.bf16.msra.mxu0 0
        %948 = vmatprep.subr.bf16.mxu0 0
        %949 = vmatpush1.bf16.msra.mxu0 0
        %950 = vmatprep.subr.bf16.mxu0 0
        %951 = vmatpush1.bf16.msra.mxu0 0
        %952 = vmatprep.subr.bf16.mxu0 0
        %953 = vmatpush1.bf16.msra.mxu0 0
        %954 = vmatprep.subr.bf16.mxu0 0
        %955 = vmatpush1.bf16.msra.mxu0 %v938
        %956 = vmatprep.subr.bf16.mxu0 0
        %957 = vmatpush1.bf16.msra.mxu0 %v937
        %958 = vmatprep.subr.bf16.mxu0 0
        %959 = vmatpush1.bf16.msra.mxu0 %v936
        %960 = vmatprep.subr.bf16.mxu0 0
        %961 = vmatpush1.bf16.msra.mxu0 %v935
        %962 = vmatprep.subr.bf16.mxu0 0
        %963 = vmatpush2.bf16.msra.mxu0 0
        %964 = vmatprep.subr.bf16.mxu0 0
        %965 = vmatpush2.bf16.msra.mxu0 0
        %966 = vmatprep.subr.bf16.mxu0 0
        %967 = vmatpush2.bf16.msra.mxu0 0
        %968 = vmatprep.subr.bf16.mxu0 0
        %969 = vmatpush2.bf16.msra.mxu0 0
        %970 = vmatprep.subr.bf16.mxu0 0
        %971 = vmatpush2.bf16.msra.mxu0 0
        %972 = vmatprep.subr.bf16.mxu0 0
        %973 = vmatpush2.bf16.msra.mxu0 0
        %974 = vmatprep.subr.bf16.mxu0 0
        %975 = vmatpush2.bf16.msra.mxu0 0
        %976 = vmatprep.subr.bf16.mxu0 0
        %977 = vmatpush2.bf16.msra.mxu0 0
        %978 = vmatprep.mubr.bf16.mxu0 0
        %979 = vmatmul.mubr.bf16.gmra.mxu0 %v944
        %v980 = vpop.f32.mrf.mxu0
        %v981 = vadd.f32 0.0, %v980
        %v982 = vpop.f32.mrf.mxu0
        %v983 = vpop.f32.mrf.mxu0
        %v984 = vadd.f32 0.0, %v983
        %v985 = vpop.f32.mrf.mxu0
        %986 = vdwg.mxu0
        %v987 = vadd.f32 %v905, %v981
        %v988 = vadd.f32 %v906, %v984
        %v989 = vld [vmem:[#allocation2 + $0xc] sm:$0xff]
        %v990 = vld [vmem:[#allocation2 + $0x14] sm:$0xff]
        %v991 = vpack.c.bf16 %v990, %v989
        %s992 = scalar_lea.vmem %s2, 256
        %v993 = vld [vmem:[%s992] sm:$0xf]
        %v994 = vld [vmem:[%s992 + $0x4] sm:$0xf]
        %v995 = vld [vmem:[%s992 + $0x8] sm:$0xf]
        %v996 = vld [vmem:[%s992 + $0xc] sm:$0xf]
        %v997 = vld [vmem:[%s992 + $0x10] sm:$0xf]
        %v998 = vld [vmem:[%s992 + $0x14] sm:$0xf]
        %v999 = vld [vmem:[%s992 + $0x18] sm:$0xf]
        %v1000 = vld [vmem:[%s992 + $0x1c] sm:$0xf]
        %v1009 = vunpack.c.l.b16 %v993
        %v1010 = vunpack.c.l.b16 %v994
        %v1011 = vunpack.c.l.b16 %v995
        %v1012 = vunpack.c.l.b16 %v996
        %v1013 = vunpack.c.l.b16 %v997
        %v1014 = vunpack.c.l.b16 %v998
        %v1015 = vunpack.c.l.b16 %v999
        %v1016 = vunpack.c.l.b16 %v1000
        %v1017 = vpack.c.b16 %v1010, %v1009
        %v1018 = vpack.c.b16 %v1012, %v1011
        %v1019 = vpack.c.b16 %v1014, %v1013
        %v1020 = vpack.c.b16 %v1016, %v1015
        %v1026 = vsel %vm329, %v991, 0
        %1028 = vmatprep.subr.bf16.mxu0 0
        %1029 = vmatpush1.bf16.msra.mxu0 0
        %1030 = vmatprep.subr.bf16.mxu0 0
        %1031 = vmatpush1.bf16.msra.mxu0 0
        %1032 = vmatprep.subr.bf16.mxu0 0
        %1033 = vmatpush1.bf16.msra.mxu0 0
        %1034 = vmatprep.subr.bf16.mxu0 0
        %1035 = vmatpush1.bf16.msra.mxu0 0
        %1036 = vmatprep.subr.bf16.mxu0 0
        %1037 = vmatpush1.bf16.msra.mxu0 %v1020
        %1038 = vmatprep.subr.bf16.mxu0 0
        %1039 = vmatpush1.bf16.msra.mxu0 %v1019
        %1040 = vmatprep.subr.bf16.mxu0 0
        %1041 = vmatpush1.bf16.msra.mxu0 %v1018
        %1042 = vmatprep.subr.bf16.mxu0 0
        %1043 = vmatpush1.bf16.msra.mxu0 %v1017
        %1044 = vmatprep.subr.bf16.mxu0 0
        %1045 = vmatpush2.bf16.msra.mxu0 0
        %1046 = vmatprep.subr.bf16.mxu0 0
        %1047 = vmatpush2.bf16.msra.mxu0 0
        %1048 = vmatprep.subr.bf16.mxu0 0
        %1049 = vmatpush2.bf16.msra.mxu0 0
        %1050 = vmatprep.subr.bf16.mxu0 0
        %1051 = vmatpush2.bf16.msra.mxu0 0
        %1052 = vmatprep.subr.bf16.mxu0 0
        %1053 = vmatpush2.bf16.msra.mxu0 0
        %1054 = vmatprep.subr.bf16.mxu0 0
        %1055 = vmatpush2.bf16.msra.mxu0 0
        %1056 = vmatprep.subr.bf16.mxu0 0
        %1057 = vmatpush2.bf16.msra.mxu0 0
        %1058 = vmatprep.subr.bf16.mxu0 0
        %1059 = vmatpush2.bf16.msra.mxu0 0
        %1060 = vmatprep.mubr.bf16.mxu0 0
        %1061 = vmatmul.mubr.bf16.gmra.mxu0 %v1026
        %v1062 = vpop.f32.mrf.mxu0
        %v1063 = vadd.f32 0.0, %v1062
        %v1064 = vpop.f32.mrf.mxu0
        %v1065 = vpop.f32.mrf.mxu0
        %v1066 = vadd.f32 0.0, %v1065
        %v1067 = vpop.f32.mrf.mxu0
        %1068 = vdwg.mxu0
        %v1069 = vadd.f32 %v987, %v1063
        %v1070 = vadd.f32 %v988, %v1066
        %v1071 = vld [vmem:[%s3] sm:$0x1]
        %v1073 = vlaneseq
        %v1074 = vshrl.u32 %v1073, 7
        %v1075 = vsub.s32 0, %v1074
        %v1076 = vrot.slane %v1071, %v1075
        %v1078 = vadd.f32 %v1069, %v1076
        %v1079 = vadd.f32 %v1070, %v1076
        %v1080 = vmax.f32 %v1078, 0.0
        %v1081 = vmax.f32 %v1079, 0.0
        %v1082 = vmin.f32 %v1080, 6.0
        %v1083 = vmin.f32 %v1081, 6.0
        %v1084 = vpack.c.bf16 %v1083, %v1082
        %v1085 = vld [vmem:[%s4] sm:$0xf]
        %v1086 = vld [vmem:[%s4 + $0x4] sm:$0xf]
        %v1087 = vld [vmem:[%s4 + $0x8] sm:$0xf]
        %v1088 = vld [vmem:[%s4 + $0xc] sm:$0xf]
        %v1089 = vld [vmem:[%s4 + $0x10] sm:$0xf]
        %v1090 = vld [vmem:[%s4 + $0x14] sm:$0xf]
        %v1091 = vld [vmem:[%s4 + $0x18] sm:$0xf]
        %v1092 = vld [vmem:[%s4 + $0x1c] sm:$0xf]
        %v1093 = vld [vmem:[%s4 + $0x20] sm:$0xf]
        %v1094 = vld [vmem:[%s4 + $0x24] sm:$0xf]
        %v1095 = vld [vmem:[%s4 + $0x28] sm:$0xf]
        %v1096 = vld [vmem:[%s4 + $0x2c] sm:$0xf]
        %v1097 = vld [vmem:[%s4 + $0x30] sm:$0xf]
        %v1098 = vld [vmem:[%s4 + $0x34] sm:$0xf]
        %v1099 = vld [vmem:[%s4 + $0x38] sm:$0xf]
        %v1100 = vld [vmem:[%s4 + $0x3c] sm:$0xf]
        %v1101 = vld [vmem:[%s5] sm:$0x1]
        %v1103 = vlaneseq
        %v1104 = vshrl.u32 %v1103, 7
        %v1105 = vsub.s32 0, %v1104
        %v1106 = vrot.slane %v1101, %v1105
        %v1124 = vunpack.c.l.b16 %v1085
        %v1125 = vunpack.c.l.b16 %v1086
        %v1126 = vunpack.c.l.b16 %v1087
        %v1127 = vunpack.c.l.b16 %v1088
        %v1128 = vunpack.c.l.b16 %v1089
        %v1129 = vunpack.c.l.b16 %v1090
        %v1130 = vunpack.c.l.b16 %v1091
        %v1131 = vunpack.c.l.b16 %v1092
        %v1132 = vunpack.c.l.b16 %v1093
        %v1133 = vunpack.c.l.b16 %v1094
        %v1134 = vunpack.c.l.b16 %v1095
        %v1135 = vunpack.c.l.b16 %v1096
        %v1136 = vunpack.c.l.b16 %v1097
        %v1137 = vunpack.c.l.b16 %v1098
        %v1138 = vunpack.c.l.b16 %v1099
        %v1139 = vunpack.c.l.b16 %v1100
        %v1140 = vpack.c.b16 %v1125, %v1124
        %v1141 = vpack.c.b16 %v1127, %v1126
        %v1142 = vpack.c.b16 %v1129, %v1128
        %v1143 = vpack.c.b16 %v1131, %v1130
        %v1144 = vpack.c.b16 %v1133, %v1132
        %v1145 = vpack.c.b16 %v1135, %v1134
        %v1146 = vpack.c.b16 %v1137, %v1136
        %v1147 = vpack.c.b16 %v1139, %v1138
        %1156 = vmatprep.subr.bf16.mxu0 0
        %1157 = vmatpush1.bf16.msra.mxu0 %v1147
        %1158 = vmatprep.subr.bf16.mxu0 0
        %1159 = vmatpush1.bf16.msra.mxu0 %v1146
        %1160 = vmatprep.subr.bf16.mxu0 0
        %1161 = vmatpush1.bf16.msra.mxu0 %v1145
        %1162 = vmatprep.subr.bf16.mxu0 0
        %1163 = vmatpush1.bf16.msra.mxu0 %v1144
        %1164 = vmatprep.subr.bf16.mxu0 0
        %1165 = vmatpush1.bf16.msra.mxu0 %v1143
        %1166 = vmatprep.subr.bf16.mxu0 0
        %1167 = vmatpush1.bf16.msra.mxu0 %v1142
        %1168 = vmatprep.subr.bf16.mxu0 0
        %1169 = vmatpush1.bf16.msra.mxu0 %v1141
        %1170 = vmatprep.subr.bf16.mxu0 0
        %1171 = vmatpush1.bf16.msra.mxu0 %v1140
        %1172 = vmatprep.subr.bf16.mxu0 0
        %1173 = vmatpush2.bf16.msra.mxu0 0
        %1174 = vmatprep.subr.bf16.mxu0 0
        %1175 = vmatpush2.bf16.msra.mxu0 0
        %1176 = vmatprep.subr.bf16.mxu0 0
        %1177 = vmatpush2.bf16.msra.mxu0 0
        %1178 = vmatprep.subr.bf16.mxu0 0
        %1179 = vmatpush2.bf16.msra.mxu0 0
        %1180 = vmatprep.subr.bf16.mxu0 0
        %1181 = vmatpush2.bf16.msra.mxu0 0
        %1182 = vmatprep.subr.bf16.mxu0 0
        %1183 = vmatpush2.bf16.msra.mxu0 0
        %1184 = vmatprep.subr.bf16.mxu0 0
        %1185 = vmatpush2.bf16.msra.mxu0 0
        %1186 = vmatprep.subr.bf16.mxu0 0
        %1187 = vmatpush2.bf16.msra.mxu0 0
        %1188 = vmatprep.mubr.bf16.mxu0 0
        %1189 = vmatmul.mubr.bf16.gmra.mxu0 %v1084
        %v1190 = vpop.f32.mrf.mxu0
        %v1191 = vadd.f32 %v1106, %v1190
        %v1192 = vpop.f32.mrf.mxu0
        %v1193 = vpop.f32.mrf.mxu0
        %v1194 = vadd.f32 %v1106, %v1193
        %v1195 = vpop.f32.mrf.mxu0
        %1196 = vdwg.mxu0
        %v1197 = vmax.f32 %v1191, 0.0
        %v1198 = vmax.f32 %v1194, 0.0
        %1199 = vst [vmem:[%s300] sm:$0xff] %v1197
        %1200 = vst [vmem:[%s300 + $0x8] sm:$0xff] %v1198
        %s1201 = sand.u32 %s184, 1
        %s1202 = scalar_lea.sflag [#allocation4], %s1201
        %s1203 = sand.u32 %s184, 1
        %s1204 = smul.addr %s1203, 16
        %s1205 = scalar_lea.vmem [#allocation3], %s1204
        // Predicated region
        $region45: #{multi_features_forward.1} parent=43 // pred_check
          %p1206 = pneg %p194
        $region46: #{multi_features_forward.1} parent=43 // pred_check_branch
          %1208 = sbr.rel (%p1206) target = $region48
        $region47: #{multi_features_forward.1} parent=43 // pred_region
          %s1209 = smul.u32 2, %s25
          %s1211 = ssub.s32 256, 256
          %1212 = vsyncadd %s1202, %s1211
          %s1213 = smul.addr %s24, 2
          %s1214 = sadd.s32 %s1209, %s1213
          %s1215 = smul.addr %s1214, 128
          %s1216 = scalar_lea.hbm %s6, %s1215
          %s1217 = sshll.u32 %s1205, 4
          %s1218 = int_to_ptr.vmem [resolvable:$true] %s1217
          %1223 = dma.vmem_to_hbm [thread:$0]  %s1218, 256, %s1216, %s1202, 128, 128, 8
        $region48: #{multi_features_forward.1} parent=43 // pred_fallthru
          _
      $region44: #{multi_features_forward.1} parent=5 // pred_fallthru
        _
      %p1224 = scmp.le.s32.totalorder 2, %s15
      // Predicated region
      $region49: #{multi_features_forward.1} parent=5 // pred_check
        %p1225 = pneg %p1224
      $region50: #{multi_features_forward.1} parent=5 // pred_check_branch
        %1227 = sbr.rel (%p1225) target = $region52
      $region51: #{multi_features_forward.1} parent=5 // pred_region
        %s1228 = ssub.s32 %s15, 2
        // Predicated region
        $region53: #{multi_features_forward.1} parent=51 // pred_check
          %p1229 = pneg %p200
        $region54: #{multi_features_forward.1} parent=51 // pred_check_branch
          %1231 = sbr.rel (%p1229) target = $region56
        $region55: #{multi_features_forward.1} parent=51 // pred_region
          %s1232 = sand.u32 %s185, 1
          %s1233 = scalar_lea.sflag [#allocation4], %s1232
          %s1234 = sand.u32 %s185, 1
          %s1235 = smul.addr %s1234, 16
          %s1236 = scalar_lea.vmem [#allocation3], %s1235
          %1237 = dma.done %s1233, 256
        $region56: #{multi_features_forward.1} parent=51 // pred_fallthru
          _
      $region52: #{multi_features_forward.1} parent=5 // pred_fallthru
        _
    $region6: #{multi_features_forward.1} parent=1 // loop_footer
      %s19 = sadd.s32 1, %s15
    $region7: #{multi_features_forward.1} parent=1 // loop_footer_branch
      %14 = sbr.rel target = $region3
    $region8: #{multi_features_forward.1} parent=1 // loop_exit
      _
    %1238 = vsyncpa [#allocation4], 1
    %s1239 = scalar_lea.sflag [#allocation4], 1
    %1240 = vsyncpa %s1239, 1

</llo_original>
